<compile_context>
chip_gen: v7x
topology: tpu7x:2x2x1
jax: 0.10.0
libtpu: 0.0.40
codegen_flags: <defaults>
</compile_context>

<pallas_src>
import functools
import math

import jax
import jax.numpy as jnp
from jax import lax
from jax.experimental import pallas as pl
from jax.experimental.pallas import tpu as pltpu


# ---------------------------------------------------------------------------
# Stage 1: fused QKV projection, emitted head-major (B, H, T, head_dim) bf16.
# ---------------------------------------------------------------------------
def _qkv_proj_kernel(x_ref, w_ref, q_ref, k_ref, v_ref, *,
                     num_heads: int, head_dim: int, d_out: int):
    bf16 = jnp.bfloat16
    x = x_ref[0].astype(bf16)                                      # (bt, d_in)
    # One wide matmul: (bt, d_in) @ (d_in, 3*d_out).  1/sqrt(hd) is folded into
    # the Q columns of w_ref at param-prep time.
    qkv = jnp.dot(x, w_ref[...], preferred_element_type=jnp.float32)
    qkv = qkv.astype(bf16)                                         # (bt, 3*d_out)
    # Head split runs once per token tile (not per kv step) -> cheap relayout.
    for h in range(num_heads):
        base = h * head_dim
        q_ref[0, h] = qkv[:, base:base + head_dim]
        k_ref[0, h] = qkv[:, d_out + base:d_out + base + head_dim]
        v_ref[0, h] = qkv[:, 2 * d_out + base:2 * d_out + base + head_dim]


# ---------------------------------------------------------------------------
# Stage 2: flash-style causal attention + output projection (+ bias) per q tile.
# ---------------------------------------------------------------------------
def _flash_attn_kernel(q_ref, k_ref, v_ref, wo_ref, bo_ref, o_ref,
                       m_ref, l_ref, acc_ref, *,
                       block_q: int, block_k: int, bf16_exp: bool):
    f32 = jnp.float32
    bf16 = jnp.bfloat16

    qi = pl.program_id(1)
    ki = pl.program_id(2)
    nk = pl.num_programs(2)

    q_start = qi * block_q
    k_start = ki * block_k
    q_last = q_start + block_q - 1
    k_last = k_start + block_k - 1

    @pl.when(ki == 0)
    def _():
        m_ref[...] = jnp.full_like(m_ref, -jnp.inf)
        l_ref[...] = jnp.zeros_like(l_ref)
        acc_ref[...] = jnp.zeros_like(acc_ref)

    is_live = k_start <= q_last       # block has at least one unmasked (row, col)
    needs_mask = k_last > q_start     # block straddles the causal diagonal

    def attend(bias):
        q = q_ref[0]                  # (H, bq, hd) bf16
        k = k_ref[0]                  # (H, bk, hd) bf16
        v = v_ref[0]                  # (H, bk, hd) bf16
        # Batched over heads: (H, bq, hd) x (H, bk, hd) -> (H, bq, bk)
        s = lax.dot_general(q, k, (((2,), (2,)), ((0,), (0,))),
                            preferred_element_type=f32)
        if bias is not None:          # only on diagonal (straddling) blocks
            s = s + bias
        m_prev = m_ref[...]                                        # (H, bq, 1)
        m_new = jnp.maximum(m_prev, jnp.max(s, axis=-1, keepdims=True))
        alpha = jnp.exp(m_prev - m_new)
        if bf16_exp:
            # v6e/v7x: EUP-bound for small head_dim -> bf16 exp ~doubles throughput.
            p = jnp.exp((s - m_new).astype(bf16))
            p_sum = jnp.sum(p.astype(f32), axis=-1, keepdims=True)
        else:
            p32 = jnp.exp(s - m_new)
            p_sum = jnp.sum(p32, axis=-1, keepdims=True)
            p = p32.astype(bf16)
        l_ref[...] = alpha * l_ref[...] + p_sum
        # (H, bq, bk) x (H, bk, hd) -> (H, bq, hd); lane-dense full-block store.
        acc_ref[...] = alpha * acc_ref[...] + lax.dot_general(
            p, v, (((2,), (1,)), ((0,), (0,))), preferred_element_type=f32)
        m_ref[...] = m_new

    @pl.when(jnp.logical_and(is_live, needs_mask))
    def _():
        rows = q_start + lax.broadcasted_iota(jnp.int32, (block_q, block_k), 0)
        cols = k_start + lax.broadcasted_iota(jnp.int32, (block_q, block_k), 1)
        bias = jnp.where(cols <= rows, 0.0, -1e30).astype(f32)[None]   # (1, bq, bk)
        attend(bias)

    @pl.when(jnp.logical_and(is_live, jnp.logical_not(needs_mask)))
    def _():
        attend(None)                  # fully-unmasked block below the diagonal

    # -------- finalize: normalize, per-head output projection, add bias --------
    @pl.when(ki == nk - 1)
    def _():
        # Exact normalization (off the critical path; addresses approx-recip concern).
        ctx = (acc_ref[...] / l_ref[...]).astype(bf16)             # (H, bq, hd)
        # Head-major W_o: sum_h ctx_h @ W_o[h] == concat(ctx) @ W_o, no relayout.
        out = lax.dot_general(ctx, wo_ref[...], (((2,), (1,)), ((0,), (0,))),
                              preferred_element_type=f32)          # (H, bq, d_out)
        out = jnp.sum(out, axis=0) + bo_ref[...]                   # (bq, d_out)
        o_ref[0] = out.astype(o_ref.dtype)
        # NOTE: nn.Dropout on attn_weights is identity at inference (eval) — omitted.


# ---------------------------------------------------------------------------
# Wrappers.
# ---------------------------------------------------------------------------
def _pick_block(T: int, target: int) -> int:
    """Largest divisor of T that is <= target and a multiple of 8, else T itself."""
    if T <= target:
        return T
    for b in range(target, 7, -1):
        if T % b == 0 and b % 8 == 0:
            return b
    return T
    # TODO(synk): pad T to a block multiple instead of falling back to full-T blocks.


def _tpu_defaults():
    """Generation-aware tile / exp-precision defaults."""
    try:
        kind = jax.devices()[0].device_kind.lower()
    except Exception:
        kind = ""
    newgen = ("v6" in kind) or ("v7" in kind) or ("tpu7" in kind)
    if newgen:   # 256-wide MXU, bf16 EUP
        return dict(block_q=256, block_k=512, bf16_exp=True)
    return dict(block_q=128, block_k=256, bf16_exp=False)


def prepare_mha_params(wq, wk, wv, wo, bo, *, num_heads: int):
    """Fuse + pre-cast weights ONCE, outside the per-call hot path.

    wq/wk/wv: (d_in, d_out); wo: (d_out, d_out); bo: (d_out,).  All stored so that
    y = x @ W (i.e. already transposed relative to nn.Linear's weight)."""
    d_in, d_out = wq.shape
    head_dim = d_out // num_heads
    scale = 1.0 / math.sqrt(head_dim)
    w_qkv = jnp.concatenate([wq * scale, wk, wv], axis=1).astype(jnp.bfloat16)
    wo_hm = wo.reshape(num_heads, head_dim, d_out).astype(jnp.bfloat16)
    bo2 = bo.reshape(1, d_out).astype(jnp.float32)
    return w_qkv, wo_hm, bo2


def multi_head_attention(x, w_qkv, wo_hm, bo, *, num_heads: int,
                         block_q=None, block_k=None, bf16_exp=None):
    """x: (B, T, d_in); w_qkv: (d_in, 3*d_out) bf16 (Q pre-scaled);
    wo_hm: (H, head_dim, d_out) bf16; bo: (1, d_out) f32."""
    B, T, d_in = x.shape
    d_out = w_qkv.shape[1] // 3
    assert d_out % num_heads == 0
    head_dim = d_out // num_heads
    H = num_heads

    defaults = _tpu_defaults()
    block_q = defaults["block_q"] if block_q is None else block_q
    block_k = defaults["block_k"] if block_k is None else block_k
    bf16_exp = defaults["bf16_exp"] if bf16_exp is None else bf16_exp

    bq = _pick_block(T, block_q)
    bk = _pick_block(T, block_k)
    bt = _pick_block(T, block_q)          # token tile for the projection pass

    vmem_limit = 64 * 1024 * 1024
    # TODO(synk): add pipeline_mode=pl.Buffered(1) on the constant-index weight specs
    # once single-buffered pipeline_mode is confirmed on all target toolchains (saves
    # the weight double-buffer VMEM on v7x / v5e).

    # ---------------- Stage 1: QKV projection (once per token) ----------------
    q_hm, k_hm, v_hm = pl.pallas_call(
        functools.partial(_qkv_proj_kernel, num_heads=H, head_dim=head_dim, d_out=d_out),
        out_shape=[jax.ShapeDtypeStruct((B, H, T, head_dim), jnp.bfloat16)] * 3,
        grid_spec=pltpu.PrefetchScalarGridSpec(
            num_scalar_prefetch=0,
            grid=(B, T // bt),
            in_specs=[
                pl.BlockSpec((1, bt, d_in), lambda b, t: (b, t, 0)),       # x tile
                pl.BlockSpec((d_in, 3 * d_out), lambda b, t: (0, 0)),      # fused W_qkv
            ],
            out_specs=[
                pl.BlockSpec((1, H, bt, head_dim), lambda b, t: (b, 0, t, 0)),
                pl.BlockSpec((1, H, bt, head_dim), lambda b, t: (b, 0, t, 0)),
                pl.BlockSpec((1, H, bt, head_dim), lambda b, t: (b, 0, t, 0)),
            ]),
        compiler_params=pltpu.CompilerParams(
            dimension_semantics=("parallel", "parallel"),
            vmem_limit_bytes=vmem_limit),
    )(x, w_qkv)

    # ---------------- Stage 2: flash attention + out_proj ----------------
    def kv_map(b, qi, ki):
        # Clamp dead (fully-masked) kv blocks to the last live one: the block index
        # repeats, so the auto-pipeline issues NO new HBM->VMEM DMA for them.
        last_live = ((qi + 1) * bq - 1) // bk
        return (b, 0, jnp.minimum(ki, last_live), 0)

    out = pl.pallas_call(
        functools.partial(_flash_attn_kernel, block_q=bq, block_k=bk, bf16_exp=bf16_exp),
        out_shape=jax.ShapeDtypeStruct((B, T, d_out), x.dtype),
        grid_spec=pltpu.PrefetchScalarGridSpec(
            num_scalar_prefetch=0,
            grid=(B, T // bq, T // bk),
            in_specs=[
                pl.BlockSpec((1, H, bq, head_dim), lambda b, qi, ki: (b, 0, qi, 0)),  # Q
                pl.BlockSpec((1, H, bk, head_dim), kv_map),                           # K
                pl.BlockSpec((1, H, bk, head_dim), kv_map),                           # V
                pl.BlockSpec((H, head_dim, d_out), lambda b, qi, ki: (0, 0, 0)),      # W_o
                pl.BlockSpec((1, d_out), lambda b, qi, ki: (0, 0)),                   # b_o
            ],
            out_specs=pl.BlockSpec((1, bq, d_out), lambda b, qi, ki: (b, qi, 0)),
            scratch_shapes=[
                pltpu.VMEM((H, bq, 1), jnp.float32),          # running max m
                pltpu.VMEM((H, bq, 1), jnp.float32),          # running denom l
                pltpu.VMEM((H, bq, head_dim), jnp.float32),   # context accumulator
            ]),
        compiler_params=pltpu.CompilerParams(
            dimension_semantics=("parallel", "parallel", "arbitrary"),
            vmem_limit_bytes=vmem_limit),
    )(q_hm, k_hm, v_hm, wo_hm, bo)

    return out


def _reference(x, wq, wk, wv, wo, bo, *, num_heads: int):
    """Pure-JAX f32 reference reproducing the PyTorch forward (dropout in eval mode)."""
    B, T, d_in = x.shape
    d_out = wq.shape[1]
    hd = d_out // num_heads
    q = (x @ wq).reshape(B, T, num_heads, hd).transpose(0, 2, 1, 3)
    k = (x @ wk).reshape(B, T, num_heads, hd).transpose(0, 2, 1, 3)
    v = (x @ wv).reshape(B, T, num_heads, hd).transpose(0, 2, 1, 3)
    s = jnp.einsum("bhqd,bhkd->bhqk", q, k)
    mask = jnp.triu(jnp.ones((T, T), bool), k=1)
    s = jnp.where(mask[None, None], -jnp.inf, s)
    w = jax.nn.softmax(s / math.sqrt(hd), axis=-1)
    ctx = jnp.einsum("bhqk,bhkd->bhqd", w, v).transpose(0, 2, 1, 3).reshape(B, T, d_out)
    return ctx @ wo + bo


if __name__ == "__main__":
    # Small shapes consistent with the module's forward.
    B, T, d_in, d_out, num_heads = 2, 8, 16, 32, 4

    key = jax.random.PRNGKey(0)
    kx, kq, kk, kv, ko, kb = jax.random.split(key, 6)

    x = jax.random.normal(kx, (B, T, d_in), dtype=jnp.float32)

    # Parameters stored already transposed to (in, out) (nn.Linear: y = x @ W.T + b).
    wq = jax.random.normal(kq, (d_in, d_out), dtype=jnp.float32) * 0.1
    wk = jax.random.normal(kk, (d_in, d_out), dtype=jnp.float32) * 0.1
    wv = jax.random.normal(kv, (d_in, d_out), dtype=jnp.float32) * 0.1
    wo = jax.random.normal(ko, (d_out, d_out), dtype=jnp.float32) * 0.1
    bo = jax.random.normal(kb, (d_out,), dtype=jnp.float32) * 0.1

    # Weight fusion / casts done once, outside the per-forward hot path.
    w_qkv, wo_hm, bo2 = prepare_mha_params(wq, wk, wv, wo, bo, num_heads=num_heads)

    out = multi_head_attention(x, w_qkv, wo_hm, bo2, num_heads=num_heads)
    out = jax.block_until_ready(out)

    ref = _reference(x, wq, wk, wv, wo, bo, num_heads=num_heads)
    assert out.shape == (B, T, d_out)
    # bf16 MXU feeds -> relaxed tolerance vs the f32 reference.
    assert jnp.allclose(out, ref, atol=2e-2, rtol=2e-2)

    print("KERNEL_OK")
</pallas_src>

<mosaic_0001>
module attributes {stable_mosaic.version = 11 : i64} {
  func.func @_qkv_proj_kernel(%arg0: i32, %arg1: i32, %arg2: memref<1x8x16xf32, #tpu.memory_space<vmem>>, %arg3: memref<16x96xbf16, #tpu.memory_space<vmem>>, %arg4: memref<1x4x8x8xbf16, #tpu.memory_space<vmem>>, %arg5: memref<1x4x8x8xbf16, #tpu.memory_space<vmem>>, %arg6: memref<1x4x8x8xbf16, #tpu.memory_space<vmem>>) attributes {dimension_semantics = [#tpu.dimension_semantics<parallel>, #tpu.dimension_semantics<parallel>], iteration_bounds = array<i64: 2, 1>, scalar_prefetch = 0 : i64, scratch_operands = 0 : i64, tpu.core_type = #tpu.core_type<tc>, window_params = [{transform_indices = @transform_0, window_bounds = array<i64: 1, 8, 16>}, {pipeline_mode = #tpu.pipeline_mode<synchronous>, transform_indices = @transform_1, window_bounds = array<i64: 16, 96>}, {transform_indices = @transform_2, window_bounds = array<i64: 1, 4, 8, 8>}, {transform_indices = @transform_3, window_bounds = array<i64: 1, 4, 8, 8>}, {transform_indices = @transform_4, window_bounds = array<i64: 1, 4, 8, 8>}]} {
    %c0 = arith.constant 0 : index
    %c0_0 = arith.constant 0 : index
    %c0_1 = arith.constant 0 : index
    %0 = vector.load %arg2[%c0, %c0_0, %c0_1] : memref<1x8x16xf32, #tpu.memory_space<vmem>>, vector<1x8x16xf32>
    %1 = vector.shape_cast %0 : vector<1x8x16xf32> to vector<8x16xf32>
    %2 = arith.truncf %1 : vector<8x16xf32> to vector<8x16xbf16>
    %c0_2 = arith.constant 0 : index
    %c0_3 = arith.constant 0 : index
    %3 = vector.load %arg3[%c0_2, %c0_3] : memref<16x96xbf16, #tpu.memory_space<vmem>>, vector<16x96xbf16>
    %cst = arith.constant dense<0.000000e+00> : vector<8x96xf32>
    %4 = tpu.matmul %2, %3, %cst {dimension_numbers = #tpu.dot_dimension_numbers<[1], [0], [0], [1], [0, 0, 1, 1], [], []>} : vector<8x16xbf16>, vector<16x96xbf16>, vector<8x96xf32> -> vector<8x96xf32>
    %5 = arith.truncf %4 : vector<8x96xf32> to vector<8x96xbf16>
    %6 = vector.extract_strided_slice %5 {offsets = [0, 0], sizes = [8, 8], strides = [1, 1]} : vector<8x96xbf16> to vector<8x8xbf16>
    %c0_4 = arith.constant 0 : index
    %c0_5 = arith.constant 0 : index
    %c0_6 = arith.constant 0 : index
    %c0_7 = arith.constant 0 : index
    %7 = vector.load %arg4[%c0_4, %c0_5, %c0_6, %c0_7] : memref<1x4x8x8xbf16, #tpu.memory_space<vmem>>, vector<1x1x8x8xbf16>
    %8 = vector.shape_cast %7 : vector<1x1x8x8xbf16> to vector<8x8xbf16>
    %9 = vector.shape_cast %6 : vector<8x8xbf16> to vector<1x1x8x8xbf16>
    tpu.vector_store %arg4[%c0_4, %c0_5, %c0_6, %c0_7], %9 {strides = array<i32>} : memref<1x4x8x8xbf16, #tpu.memory_space<vmem>>, vector<1x1x8x8xbf16>,
    %10 = vector.extract_strided_slice %5 {offsets = [0, 32], sizes = [8, 8], strides = [1, 1]} : vector<8x96xbf16> to vector<8x8xbf16>
    %c0_8 = arith.constant 0 : index
    %c0_9 = arith.constant 0 : index
    %c0_10 = arith.constant 0 : index
    %c0_11 = arith.constant 0 : index
    %11 = vector.load %arg5[%c0_8, %c0_9, %c0_10, %c0_11] : memref<1x4x8x8xbf16, #tpu.memory_space<vmem>>, vector<1x1x8x8xbf16>
    %12 = vector.shape_cast %11 : vector<1x1x8x8xbf16> to vector<8x8xbf16>
    %13 = vector.shape_cast %10 : vector<8x8xbf16> to vector<1x1x8x8xbf16>
    tpu.vector_store %arg5[%c0_8, %c0_9, %c0_10, %c0_11], %13 {strides = array<i32>} : memref<1x4x8x8xbf16, #tpu.memory_space<vmem>>, vector<1x1x8x8xbf16>,
    %14 = vector.extract_strided_slice %5 {offsets = [0, 64], sizes = [8, 8], strides = [1, 1]} : vector<8x96xbf16> to vector<8x8xbf16>
    %c0_12 = arith.constant 0 : index
    %c0_13 = arith.constant 0 : index
    %c0_14 = arith.constant 0 : index
    %c0_15 = arith.constant 0 : index
    %15 = vector.load %arg6[%c0_12, %c0_13, %c0_14, %c0_15] : memref<1x4x8x8xbf16, #tpu.memory_space<vmem>>, vector<1x1x8x8xbf16>
    %16 = vector.shape_cast %15 : vector<1x1x8x8xbf16> to vector<8x8xbf16>
    %17 = vector.shape_cast %14 : vector<8x8xbf16> to vector<1x1x8x8xbf16>
    tpu.vector_store %arg6[%c0_12, %c0_13, %c0_14, %c0_15], %17 {strides = array<i32>} : memref<1x4x8x8xbf16, #tpu.memory_space<vmem>>, vector<1x1x8x8xbf16>,
    %18 = vector.extract_strided_slice %5 {offsets = [0, 8], sizes = [8, 8], strides = [1, 1]} : vector<8x96xbf16> to vector<8x8xbf16>
    %c0_16 = arith.constant 0 : index
    %c1 = arith.constant 1 : index
    %c0_17 = arith.constant 0 : index
    %c0_18 = arith.constant 0 : index
    %19 = vector.load %arg4[%c0_16, %c1, %c0_17, %c0_18] : memref<1x4x8x8xbf16, #tpu.memory_space<vmem>>, vector<1x1x8x8xbf16>
    %20 = vector.shape_cast %19 : vector<1x1x8x8xbf16> to vector<8x8xbf16>
    %21 = vector.shape_cast %18 : vector<8x8xbf16> to vector<1x1x8x8xbf16>
    tpu.vector_store %arg4[%c0_16, %c1, %c0_17, %c0_18], %21 {strides = array<i32>} : memref<1x4x8x8xbf16, #tpu.memory_space<vmem>>, vector<1x1x8x8xbf16>,
    %22 = vector.extract_strided_slice %5 {offsets = [0, 40], sizes = [8, 8], strides = [1, 1]} : vector<8x96xbf16> to vector<8x8xbf16>
    %c0_19 = arith.constant 0 : index
    %c1_20 = arith.constant 1 : index
    %c0_21 = arith.constant 0 : index
    %c0_22 = arith.constant 0 : index
    %23 = vector.load %arg5[%c0_19, %c1_20, %c0_21, %c0_22] : memref<1x4x8x8xbf16, #tpu.memory_space<vmem>>, vector<1x1x8x8xbf16>
    %24 = vector.shape_cast %23 : vector<1x1x8x8xbf16> to vector<8x8xbf16>
    %25 = vector.shape_cast %22 : vector<8x8xbf16> to vector<1x1x8x8xbf16>
    tpu.vector_store %arg5[%c0_19, %c1_20, %c0_21, %c0_22], %25 {strides = array<i32>} : memref<1x4x8x8xbf16, #tpu.memory_space<vmem>>, vector<1x1x8x8xbf16>,
    %26 = vector.extract_strided_slice %5 {offsets = [0, 72], sizes = [8, 8], strides = [1, 1]} : vector<8x96xbf16> to vector<8x8xbf16>
    %c0_23 = arith.constant 0 : index
    %c1_24 = arith.constant 1 : index
    %c0_25 = arith.constant 0 : index
    %c0_26 = arith.constant 0 : index
    %27 = vector.load %arg6[%c0_23, %c1_24, %c0_25, %c0_26] : memref<1x4x8x8xbf16, #tpu.memory_space<vmem>>, vector<1x1x8x8xbf16>
    %28 = vector.shape_cast %27 : vector<1x1x8x8xbf16> to vector<8x8xbf16>
    %29 = vector.shape_cast %26 : vector<8x8xbf16> to vector<1x1x8x8xbf16>
    tpu.vector_store %arg6[%c0_23, %c1_24, %c0_25, %c0_26], %29 {strides = array<i32>} : memref<1x4x8x8xbf16, #tpu.memory_space<vmem>>, vector<1x1x8x8xbf16>,
    %30 = vector.extract_strided_slice %5 {offsets = [0, 16], sizes = [8, 8], strides = [1, 1]} : vector<8x96xbf16> to vector<8x8xbf16>
    %c0_27 = arith.constant 0 : index
    %c2 = arith.constant 2 : index
    %c0_28 = arith.constant 0 : index
    %c0_29 = arith.constant 0 : index
    %31 = vector.load %arg4[%c0_27, %c2, %c0_28, %c0_29] : memref<1x4x8x8xbf16, #tpu.memory_space<vmem>>, vector<1x1x8x8xbf16>
    %32 = vector.shape_cast %31 : vector<1x1x8x8xbf16> to vector<8x8xbf16>
    %33 = vector.shape_cast %30 : vector<8x8xbf16> to vector<1x1x8x8xbf16>
    tpu.vector_store %arg4[%c0_27, %c2, %c0_28, %c0_29], %33 {strides = array<i32>} : memref<1x4x8x8xbf16, #tpu.memory_space<vmem>>, vector<1x1x8x8xbf16>,
    %34 = vector.extract_strided_slice %5 {offsets = [0, 48], sizes = [8, 8], strides = [1, 1]} : vector<8x96xbf16> to vector<8x8xbf16>
    %c0_30 = arith.constant 0 : index
    %c2_31 = arith.constant 2 : index
    %c0_32 = arith.constant 0 : index
    %c0_33 = arith.constant 0 : index
    %35 = vector.load %arg5[%c0_30, %c2_31, %c0_32, %c0_33] : memref<1x4x8x8xbf16, #tpu.memory_space<vmem>>, vector<1x1x8x8xbf16>
    %36 = vector.shape_cast %35 : vector<1x1x8x8xbf16> to vector<8x8xbf16>
    %37 = vector.shape_cast %34 : vector<8x8xbf16> to vector<1x1x8x8xbf16>
    tpu.vector_store %arg5[%c0_30, %c2_31, %c0_32, %c0_33], %37 {strides = array<i32>} : memref<1x4x8x8xbf16, #tpu.memory_space<vmem>>, vector<1x1x8x8xbf16>,
    %38 = vector.extract_strided_slice %5 {offsets = [0, 80], sizes = [8, 8], strides = [1, 1]} : vector<8x96xbf16> to vector<8x8xbf16>
    %c0_34 = arith.constant 0 : index
    %c2_35 = arith.constant 2 : index
    %c0_36 = arith.constant 0 : index
    %c0_37 = arith.constant 0 : index
    %39 = vector.load %arg6[%c0_34, %c2_35, %c0_36, %c0_37] : memref<1x4x8x8xbf16, #tpu.memory_space<vmem>>, vector<1x1x8x8xbf16>
    %40 = vector.shape_cast %39 : vector<1x1x8x8xbf16> to vector<8x8xbf16>
    %41 = vector.shape_cast %38 : vector<8x8xbf16> to vector<1x1x8x8xbf16>
    tpu.vector_store %arg6[%c0_34, %c2_35, %c0_36, %c0_37], %41 {strides = array<i32>} : memref<1x4x8x8xbf16, #tpu.memory_space<vmem>>, vector<1x1x8x8xbf16>,
    %42 = vector.extract_strided_slice %5 {offsets = [0, 24], sizes = [8, 8], strides = [1, 1]} : vector<8x96xbf16> to vector<8x8xbf16>
    %c0_38 = arith.constant 0 : index
    %c3 = arith.constant 3 : index
    %c0_39 = arith.constant 0 : index
    %c0_40 = arith.constant 0 : index
    %43 = vector.load %arg4[%c0_38, %c3, %c0_39, %c0_40] : memref<1x4x8x8xbf16, #tpu.memory_space<vmem>>, vector<1x1x8x8xbf16>
    %44 = vector.shape_cast %43 : vector<1x1x8x8xbf16> to vector<8x8xbf16>
    %45 = vector.shape_cast %42 : vector<8x8xbf16> to vector<1x1x8x8xbf16>
    tpu.vector_store %arg4[%c0_38, %c3, %c0_39, %c0_40], %45 {strides = array<i32>} : memref<1x4x8x8xbf16, #tpu.memory_space<vmem>>, vector<1x1x8x8xbf16>,
    %46 = vector.extract_strided_slice %5 {offsets = [0, 56], sizes = [8, 8], strides = [1, 1]} : vector<8x96xbf16> to vector<8x8xbf16>
    %c0_41 = arith.constant 0 : index
    %c3_42 = arith.constant 3 : index
    %c0_43 = arith.constant 0 : index
    %c0_44 = arith.constant 0 : index
    %47 = vector.load %arg5[%c0_41, %c3_42, %c0_43, %c0_44] : memref<1x4x8x8xbf16, #tpu.memory_space<vmem>>, vector<1x1x8x8xbf16>
    %48 = vector.shape_cast %47 : vector<1x1x8x8xbf16> to vector<8x8xbf16>
    %49 = vector.shape_cast %46 : vector<8x8xbf16> to vector<1x1x8x8xbf16>
    tpu.vector_store %arg5[%c0_41, %c3_42, %c0_43, %c0_44], %49 {strides = array<i32>} : memref<1x4x8x8xbf16, #tpu.memory_space<vmem>>, vector<1x1x8x8xbf16>,
    %50 = vector.extract_strided_slice %5 {offsets = [0, 88], sizes = [8, 8], strides = [1, 1]} : vector<8x96xbf16> to vector<8x8xbf16>
    %c0_45 = arith.constant 0 : index
    %c3_46 = arith.constant 3 : index
    %c0_47 = arith.constant 0 : index
    %c0_48 = arith.constant 0 : index
    %51 = vector.load %arg6[%c0_45, %c3_46, %c0_47, %c0_48] : memref<1x4x8x8xbf16, #tpu.memory_space<vmem>>, vector<1x1x8x8xbf16>
    %52 = vector.shape_cast %51 : vector<1x1x8x8xbf16> to vector<8x8xbf16>
    %53 = vector.shape_cast %50 : vector<8x8xbf16> to vector<1x1x8x8xbf16>
    tpu.vector_store %arg6[%c0_45, %c3_46, %c0_47, %c0_48], %53 {strides = array<i32>} : memref<1x4x8x8xbf16, #tpu.memory_space<vmem>>, vector<1x1x8x8xbf16>,
    return
  }
  func.func @transform_0(%arg0: i32, %arg1: i32) -> (i32, i32, i32) {
    %c0_i32 = arith.constant 0 : i32
    %c0_i32_0 = arith.constant 0 : i32
    return %arg0, %arg1, %c0_i32 : i32, i32, i32
  }
  func.func @transform_1(%arg0: i32, %arg1: i32) -> (i32, i32) {
    %c0_i32 = arith.constant 0 : i32
    %c0_i32_0 = arith.constant 0 : i32
    %c0_i32_1 = arith.constant 0 : i32
    return %c0_i32, %c0_i32_0 : i32, i32
  }
  func.func @transform_2(%arg0: i32, %arg1: i32) -> (i32, i32, i32, i32) {
    %c0_i32 = arith.constant 0 : i32
    %c0_i32_0 = arith.constant 0 : i32
    %c0_i32_1 = arith.constant 0 : i32
    return %arg0, %c0_i32, %arg1, %c0_i32_0 : i32, i32, i32, i32
  }
  func.func @transform_3(%arg0: i32, %arg1: i32) -> (i32, i32, i32, i32) {
    %c0_i32 = arith.constant 0 : i32
    %c0_i32_0 = arith.constant 0 : i32
    %c0_i32_1 = arith.constant 0 : i32
    return %arg0, %c0_i32, %arg1, %c0_i32_0 : i32, i32, i32, i32
  }
  func.func @transform_4(%arg0: i32, %arg1: i32) -> (i32, i32, i32, i32) {
    %c0_i32 = arith.constant 0 : i32
    %c0_i32_0 = arith.constant 0 : i32
    %c0_i32_1 = arith.constant 0 : i32
    return %arg0, %c0_i32, %arg1, %c0_i32_0 : i32, i32, i32, i32
  }
}

</mosaic_0001>

<llo_original>
// kernel: tpu_custom_call.1
$region0: #{tpu_custom_call.1}
  #allocation0 [shape = 'u32[]', space=smem, size = 0x4, offset = 0x4, fixed_abs, tag = 'smem constant byte address 0x4 - core index']
  #allocation1 [shape = 'u32[144,128]{1,0:T(1,128)}', space=vmem, size = 0x12000, scoped, tag = 'internal scratch']
  %s0 = inlined_call_operand.hbm [shape: f32[2,8,16], index: 0, kind: input, shape index: {}]
  %s1 = inlined_call_operand.hbm [shape: bf16[16,96], index: 1, kind: input, shape index: {}]
  %s2 = inlined_call_operand.hbm [shape: bf16[2,4,8,8], index: 2, kind: output, shape index: {0}]
  %s3 = inlined_call_operand.hbm [shape: bf16[2,4,8,8], index: 3, kind: output, shape index: {1}]
  %s4 = inlined_call_operand.hbm [shape: bf16[2,4,8,8], index: 4, kind: output, shape index: {2}]
  %5 = xla_tuple %s2, %s3, %s4
  %s6 = sld [smem:[#allocation0]]
  $region65: #{tpu_custom_call.1} parent=0
    _
  %s8 = ssub.s32 1, %s6
  %s9 = scalar_select 0, %s8, %s6
  $region1: #{tpu_custom_call.1} parent=0
    #allocation2 [shape = 'u8[8192]{0}', space=vmem, size = 0x2000, scoped, tag = 'input window, operand 0']
    #allocation3 [shape = 's32[2]{0}', space=sflag, size = 0x8, scoped, tag = 'scoped memory for tpu_custom_call.1']
    #allocation4 [shape = 's32[2]{0}', space=sflag, size = 0x8, scoped, tag = 'scoped memory for tpu_custom_call.1']
    #allocation5 [shape = 'u8[4096]{0}', space=vmem, size = 0x1000, scoped, tag = 'input window, operand 1, single buffered']
    #allocation6 [shape = 's32[1]{0}', space=sflag, size = 0x4, scoped, tag = 'scoped memory for tpu_custom_call.1']
    #allocation7 [shape = 'u8[16384]{0}', space=vmem, size = 0x4000, scoped, tag = 'output window, operand 0']
    #allocation8 [shape = 'u8[16384]{0}', space=vmem, size = 0x4000, scoped, tag = 'output window, operand 1']
    #allocation9 [shape = 's32[2]{0}', space=sflag, size = 0x8, scoped, tag = 'scoped memory for tpu_custom_call.1']
    #allocation10 [shape = 'u8[16384]{0}', space=vmem, size = 0x4000, scoped, tag = 'output window, operand 2']
    %10 = vsyncpa [#allocation3], 0
    %s11 = scalar_lea.sflag [#allocation3], 1
    %12 = vsyncpa %s11, 0
    %13 = vsyncpa [#allocation6], 0
    %14 = vsyncpa [#allocation4], 0
    %s15 = scalar_lea.sflag [#allocation4], 1
    %16 = vsyncpa %s15, 0
    %17 = vsyncpa [#allocation9], 0
    %s18 = scalar_lea.sflag [#allocation9], 1
    %19 = vsyncpa %s18, 0
    loop: start=0, step=1, limit=4
    $region2: #{tpu_custom_call.1} parent=1 // loop_pre_header
      _
    $region3: #{tpu_custom_call.1} parent=1 // loop_header
      %s21 = sphi 0, %s25
      %p22 = scmp.ge.s32.totalorder %s21, 4
      %s28 = sphi 0, %s40
      %s29 = sphi 0, %s36
      %s30 = sphi 0, %s28
      %s31 = sphi 0, %s29
      %s32 = sphi 0, %s30
      %s33 = sphi 0, %s31
      %s45 = sphi 0, %s47
      %s48 = sphi 0, %s45
      %s49 = sphi 0, %s48
      %s65 = sphi 0, %s49
      %s69 = sphi 0, %s69
      %s71 = sphi 0, %s69
      %s72 = sphi 0, %s71
      %s86 = sphi 0, %s72
      %s94 = sphi 0, %s96
      %s97 = sphi 0, %s94
      %s98 = sphi 0, %s97
      %s114 = sphi 0, %s98
      %s122 = sphi 0, %s124
      %s125 = sphi 0, %s122
      %s126 = sphi 0, %s125
      %s142 = sphi 0, %s126
      %s150 = sphi 0, %s152
      %s153 = sphi 0, %s150
      %s154 = sphi 0, %s153
      %s170 = sphi 0, %s154
    $region4: #{tpu_custom_call.1} parent=1 // loop_header_branch
      %24 = sbr.rel (%p22) target = $region8
    $region5: #{tpu_custom_call.1} parent=1 // loop_body
      %s26 = ssub.s32 %s21, 1
      %s27 = ssub.s32 %s21, 2
      %s34 = sadd.s32 1, %s29
      %p35 = scmp.ge.s32.totalorder %s34, 1
      %s36 = scalar_select %p35, 0, %s34
      %s37 = sadd.s32 1, %s28
      %s38 = scalar_select %p35, %s37, %s28
      %p39 = scmp.ge.s32.totalorder %s38, 2
      %s40 = scalar_select %p39, 0, %s38
      %s41 = ssub.s32 %s28, %s40
      %s42 = ssub.s32 %s29, %s36
      %s43 = sor.u32 %s41, %s42
      %p44 = scmp.eq.s32.totalorder %s43, 0
      %s46 = sadd.s32 %s45, 1
      %s47 = scalar_select %p44, %s45, %s46
      %p50 = pneg %p44
      %p51 = scmp.eq.s32.totalorder %s21, 1
      %p52 = por %p50, %p51
      %p53 = scmp.ne.s32.totalorder %s45, %s48
      %p54 = scmp.eq.s32.totalorder %s21, 0
      %p55 = por %p53, %p54
      %p56 = scmp.ne.s32.totalorder %s45, %s48
      %p57 = scmp.eq.s32.totalorder %s26, 1
      %p58 = por %p56, %p57
      %p59 = scmp.ne.s32.totalorder %s48, %s49
      %p60 = scmp.eq.s32.totalorder %s26, 0
      %p61 = por %p59, %p60
      %p62 = scmp.ne.s32.totalorder %s48, %s49
      %p63 = scmp.eq.s32.totalorder %s27, 1
      %p64 = por %p62, %p63
      %p66 = scmp.ne.s32.totalorder %s49, %s65
      %p67 = scmp.eq.s32.totalorder %s27, 0
      %p68 = por %p66, %p67
      %s70 = sadd.s32 %s69, 1
      %p73 = scmp.eq.s32.totalorder %s21, 1
      %p74 = scmp.ne.s32.totalorder %s69, %s71
      %p75 = scmp.eq.s32.totalorder %s21, 0
      %p76 = por %p74, %p75
      %p77 = scmp.ne.s32.totalorder %s69, %s71
      %p78 = scmp.eq.s32.totalorder %s26, 1
      %p79 = por %p77, %p78
      %p80 = scmp.ne.s32.totalorder %s71, %s72
      %p81 = scmp.eq.s32.totalorder %s26, 0
      %p82 = por %p80, %p81
      %p83 = scmp.ne.s32.totalorder %s71, %s72
      %p84 = scmp.eq.s32.totalorder %s27, 1
      %p85 = por %p83, %p84
      %p87 = scmp.ne.s32.totalorder %s72, %s86
      %p88 = scmp.eq.s32.totalorder %s27, 0
      %p89 = por %p87, %p88
      %s90 = ssub.s32 %s28, %s40
      %s91 = ssub.s32 %s29, %s36
      %s92 = sor.u32 %s90, %s91
      %p93 = scmp.eq.s32.totalorder %s92, 0
      %s95 = sadd.s32 %s94, 1
      %s96 = scalar_select %p93, %s94, %s95
      %p99 = pneg %p93
      %p100 = scmp.eq.s32.totalorder %s21, 1
      %p101 = por %p99, %p100
      %p102 = scmp.ne.s32.totalorder %s94, %s97
      %p103 = scmp.eq.s32.totalorder %s21, 0
      %p104 = por %p102, %p103
      %p105 = scmp.ne.s32.totalorder %s94, %s97
      %p106 = scmp.eq.s32.totalorder %s26, 1
      %p107 = por %p105, %p106
      %p108 = scmp.ne.s32.totalorder %s97, %s98
      %p109 = scmp.eq.s32.totalorder %s26, 0
      %p110 = por %p108, %p109
      %p111 = scmp.ne.s32.totalorder %s97, %s98
      %p112 = scmp.eq.s32.totalorder %s27, 1
      %p113 = por %p111, %p112
      %p115 = scmp.ne.s32.totalorder %s98, %s114
      %p116 = scmp.eq.s32.totalorder %s27, 0
      %p117 = por %p115, %p116
      %s118 = ssub.s32 %s28, %s40
      %s119 = ssub.s32 %s29, %s36
      %s120 = sor.u32 %s118, %s119
      %p121 = scmp.eq.s32.totalorder %s120, 0
      %s123 = sadd.s32 %s122, 1
      %s124 = scalar_select %p121, %s122, %s123
      %p127 = pneg %p121
      %p128 = scmp.eq.s32.totalorder %s21, 1
      %p129 = por %p127, %p128
      %p130 = scmp.ne.s32.totalorder %s122, %s125
      %p131 = scmp.eq.s32.totalorder %s21, 0
      %p132 = por %p130, %p131
      %p133 = scmp.ne.s32.totalorder %s122, %s125
      %p134 = scmp.eq.s32.totalorder %s26, 1
      %p135 = por %p133, %p134
      %p136 = scmp.ne.s32.totalorder %s125, %s126
      %p137 = scmp.eq.s32.totalorder %s26, 0
      %p138 = por %p136, %p137
      %p139 = scmp.ne.s32.totalorder %s125, %s126
      %p140 = scmp.eq.s32.totalorder %s27, 1
      %p141 = por %p139, %p140
      %p143 = scmp.ne.s32.totalorder %s126, %s142
      %p144 = scmp.eq.s32.totalorder %s27, 0
      %p145 = por %p143, %p144
      %s146 = ssub.s32 %s28, %s40
      %s147 = ssub.s32 %s29, %s36
      %s148 = sor.u32 %s146, %s147
      %p149 = scmp.eq.s32.totalorder %s148, 0
      %s151 = sadd.s32 %s150, 1
      %s152 = scalar_select %p149, %s150, %s151
      %p155 = pneg %p149
      %p156 = scmp.eq.s32.totalorder %s21, 1
      %p157 = por %p155, %p156
      %p158 = scmp.ne.s32.totalorder %s150, %s153
      %p159 = scmp.eq.s32.totalorder %s21, 0
      %p160 = por %p158, %p159
      %p161 = scmp.ne.s32.totalorder %s150, %s153
      %p162 = scmp.eq.s32.totalorder %s26, 1
      %p163 = por %p161, %p162
      %p164 = scmp.ne.s32.totalorder %s153, %s154
      %p165 = scmp.eq.s32.totalorder %s26, 0
      %p166 = por %p164, %p165
      %p167 = scmp.ne.s32.totalorder %s153, %s154
      %p168 = scmp.eq.s32.totalorder %s27, 1
      %p169 = por %p167, %p168
      %p171 = scmp.ne.s32.totalorder %s154, %s170
      %p172 = scmp.eq.s32.totalorder %s27, 0
      %p173 = por %p171, %p172
      %p174 = scmp.le.s32.totalorder 1, %s21
      %p175 = scmp.lt.s32.totalorder %s21, 3
      %p176 = pnand %p174, %p175
      %p177 = pneg %p176
      // Predicated region
      $region9: #{tpu_custom_call.1} parent=5 // pred_check
        _
      $region10: #{tpu_custom_call.1} parent=5 // pred_check_branch
        %179 = sbr.rel (%p176) target = $region12
      $region11: #{tpu_custom_call.1} parent=5 // pred_region
        %s180 = ssub.s32 %s21, 1
        // Predicated region
        $region13: #{tpu_custom_call.1} parent=11 // pred_check
          %p181 = pneg %p82
        $region14: #{tpu_custom_call.1} parent=11 // pred_check_branch
          %183 = sbr.rel (%p181) target = $region16
        $region15: #{tpu_custom_call.1} parent=11 // pred_region
          %s185 = ssub.s32 128, 128
          %186 = vsyncadd [#allocation6], %s185
          %s187 = sshll.u32 [#allocation5], 4
          %s188 = int_to_ptr.vmem [resolvable:$true] %s187
          %193 = dma.hbm_to_vmem [thread:$0]  %s1, 128, %s188, [#allocation6], 64, 64, 4
        $region16: #{tpu_custom_call.1} parent=11 // pred_fallthru
          _
      $region12: #{tpu_custom_call.1} parent=5 // pred_fallthru
        _
      %p194 = scmp.lt.s32.totalorder %s21, 2
      // Predicated region
      $region17: #{tpu_custom_call.1} parent=5 // pred_check
        %p195 = pneg %p194
      $region18: #{tpu_custom_call.1} parent=5 // pred_check_branch
        %197 = sbr.rel (%p195) target = $region20
      $region19: #{tpu_custom_call.1} parent=5 // pred_region
        // Predicated region
        $region21: #{tpu_custom_call.1} parent=19 // pred_check
          %p198 = pneg %p55
        $region22: #{tpu_custom_call.1} parent=19 // pred_check_branch
          %200 = sbr.rel (%p198) target = $region24
        $region23: #{tpu_custom_call.1} parent=19 // pred_region
          %s201 = sand.u32 %s45, 1
          %s202 = scalar_lea.sflag [#allocation3], %s201
          %s203 = sand.u32 %s45, 1
          %s204 = smul.addr %s203, 8
          %s205 = scalar_lea.vmem [#allocation2], %s204
          %s207 = ssub.s32 128, 128
          %208 = vsyncadd %s202, %s207
          %s209 = sadd.s32 %s29, %s28
          %s210 = smul.addr %s209, 128
          %s211 = scalar_lea.hbm %s0, %s210
          %s213 = sshll.u32 %s205, 4
          %s214 = int_to_ptr.vmem [resolvable:$true] %s213
          %216 = dma.hbm_to_vmem [thread:$0]  %s211, 128, %s214, %s202
        $region24: #{tpu_custom_call.1} parent=19 // pred_fallthru
          _
      $region20: #{tpu_custom_call.1} parent=5 // pred_fallthru
        _
      %p217 = scmp.le.s32.totalorder 1, %s21
      %p218 = scmp.lt.s32.totalorder %s21, 3
      %p219 = pnand %p217, %p218
      %p220 = pneg %p219
      // Predicated region
      $region25: #{tpu_custom_call.1} parent=5 // pred_check
        _
      $region26: #{tpu_custom_call.1} parent=5 // pred_check_branch
        %222 = sbr.rel (%p219) target = $region28
      $region27: #{tpu_custom_call.1} parent=5 // pred_region
        %s223 = ssub.s32 %s21, 1
        %s224 = sand.u32 %s48, 1
        %s225 = scalar_lea.sflag [#allocation3], %s224
        %s226 = sand.u32 %s48, 1
        %s227 = smul.addr %s226, 8
        %s228 = scalar_lea.vmem [#allocation2], %s227
        // Predicated region
        $region29: #{tpu_custom_call.1} parent=27 // pred_check
          %p229 = pneg %p61
        $region30: #{tpu_custom_call.1} parent=27 // pred_check_branch
          %231 = sbr.rel (%p229) target = $region32
        $region31: #{tpu_custom_call.1} parent=27 // pred_region
          %232 = dma.done %s225, 128
        $region32: #{tpu_custom_call.1} parent=27 // pred_fallthru
          _
        // Predicated region
        $region33: #{tpu_custom_call.1} parent=27 // pred_check
          %p233 = pneg %p82
        $region34: #{tpu_custom_call.1} parent=27 // pred_check_branch
          %235 = sbr.rel (%p233) target = $region36
        $region35: #{tpu_custom_call.1} parent=27 // pred_region
          %236 = dma.done [#allocation6], 128
        $region36: #{tpu_custom_call.1} parent=27 // pred_fallthru
          _
        %s237 = sand.u32 %s48, 1
        %s238 = scalar_lea.sflag [#allocation3], %s237
        %s239 = sand.u32 %s48, 1
        %s240 = smul.addr %s239, 8
        %s241 = scalar_lea.vmem [#allocation2], %s240
        %p242 = pneg %p61
        %p243 = pneg %p58
        %p244 = pneg %p82
        %p245 = pneg %p79
        %p246 = pneg %p110
        %p247 = pneg %p107
        %s248 = sand.u32 %s97, 1
        %s249 = scalar_lea.sflag [#allocation4], %s248
        %s250 = sand.u32 %s97, 1
        %s251 = smul.addr %s250, 16
        %s252 = scalar_lea.vmem [#allocation7], %s251
        %p253 = pneg %p138
        %p254 = pneg %p135
        %s255 = sand.u32 %s26, 1
        %s256 = scalar_lea.sflag [#allocation9], %s255
        %s257 = sand.u32 %s125, 1
        %s258 = smul.addr %s257, 16
        %s259 = scalar_lea.vmem [#allocation8], %s258
        %p260 = pneg %p166
        %p261 = pneg %p163
        %s262 = sand.u32 %s26, 1
        %s263 = scalar_lea.sflag [#allocation9], %s262
        %s264 = sand.u32 %s153, 1
        %s265 = smul.addr %s264, 16
        %s266 = scalar_lea.vmem [#allocation10], %s265
        %v268 = vld [vmem:[%s228] sm:$0xff]
        %v269 = vpack.c.bf16 %v268, %v268
        %v270 = vld [vmem:[#allocation5] sm:$0xf]
        %v271 = vld [vmem:[#allocation5 + $0x4] sm:$0xf]
        %v274 = vunpack.c.l.b16 %v270
        %v275 = vunpack.c.l.b16 %v271
        %v276 = vpack.c.b16 %v275, %v274
        %vm278 = vcmask 130048
        %v280 = vsel %vm278, %v269, 0
        %282 = vmatprep.subr.bf16.mxu0 0
        %283 = vmatpush1.bf16.msra.mxu0 %v276
        %284 = vmatprep.subr.bf16.mxu0 0
        %285 = vmatpush1.bf16.msra.mxu0 0
        %286 = vmatprep.subr.bf16.mxu0 0
        %287 = vmatpush1.bf16.msra.mxu0 0
        %288 = vmatprep.subr.bf16.mxu0 0
        %289 = vmatpush1.bf16.msra.mxu0 0
        %290 = vmatprep.subr.bf16.mxu0 0
        %291 = vmatpush1.bf16.msra.mxu0 0
        %292 = vmatprep.subr.bf16.mxu0 0
        %293 = vmatpush1.bf16.msra.mxu0 0
        %294 = vmatprep.subr.bf16.mxu0 0
        %295 = vmatpush1.bf16.msra.mxu0 0
        %296 = vmatprep.subr.bf16.mxu0 0
        %297 = vmatpush1.bf16.msra.mxu0 0
        %298 = vmatprep.subr.bf16.mxu0 0
        %299 = vmatpush1.bf16.msra.mxu0 0
        %300 = vmatprep.subr.bf16.mxu0 0
        %301 = vmatpush1.bf16.msra.mxu0 0
        %302 = vmatprep.subr.bf16.mxu0 0
        %303 = vmatpush1.bf16.msra.mxu0 0
        %304 = vmatprep.subr.bf16.mxu0 0
        %305 = vmatpush1.bf16.msra.mxu0 0
        %306 = vmatprep.subr.bf16.mxu0 0
        %307 = vmatpush1.bf16.msra.mxu0 0
        %308 = vmatprep.subr.bf16.mxu0 0
        %309 = vmatpush1.bf16.msra.mxu0 0
        %310 = vmatprep.subr.bf16.mxu0 0
        %311 = vmatpush1.bf16.msra.mxu0 0
        %312 = vmatprep.subr.bf16.mxu0 0
        %313 = vmatpush1.bf16.msra.mxu0 0
        %314 = vmatprep.mubr.bf16.mxu0 0
        %315 = vmatmul.mubr.bf16.gmra.mrb[0].mxu0 %v280
        %v316 = vpop.f32.mrb[0].mxu0
        %v317 = vadd.f32 0.0, %v316
        %v318 = vpop.f32.mrb[0].mxu0
        %v319 = vpop.f32.mrb[0].mxu0
        %v320 = vpop.f32.mrb[0].mxu0
        %321 = vdwg.mxu0
        %v322 = vpack.c.bf16 %v317, %v317
        %vm323 = vcmask 60416
        %324 = vst.msk [vmem:[%s252] sm:$0xf] %vm323, %v322
        %v326 = vunpack.c.l.b16 %v322
        %v327 = vpack.c.b16 %v326, %v326
        %328 = vrot.lane.b32.xlu0 %v327, 96
        %v329 = vpop.permute.xlu0 %328
        %331 = vst.msk [vmem:[%s259] sm:$0xf] %vm323, %v329
        %332 = vrot.lane.b32.xlu0 %v327, 64
        %v333 = vpop.permute.xlu0 %332
        %335 = vst.msk [vmem:[%s266] sm:$0xf] %vm323, %v333
        %336 = vrot.lane.b32.xlu0 %v327, 120
        %v337 = vpop.permute.xlu0 %336
        %s339 = scalar_lea.vmem %s252, 4 [#allocation7]
        %340 = vst.msk [vmem:[%s339] sm:$0xf] %vm323, %v337
        %341 = vrot.lane.b32.xlu0 %v327, 88
        %v342 = vpop.permute.xlu0 %341
        %s344 = scalar_lea.vmem %s259, 4 [#allocation8]
        %345 = vst.msk [vmem:[%s344] sm:$0xf] %vm323, %v342
        %346 = vrot.lane.b32.xlu0 %v327, 56
        %v347 = vpop.permute.xlu0 %346
        %s349 = scalar_lea.vmem %s266, 4 [#allocation10]
        %350 = vst.msk [vmem:[%s349] sm:$0xf] %vm323, %v347
        %351 = vrot.lane.b32.xlu0 %v327, 112
        %v352 = vpop.permute.xlu0 %351
        %s354 = scalar_lea.vmem %s252, 8 [#allocation7]
        %355 = vst.msk [vmem:[%s354] sm:$0xf] %vm323, %v352
        %356 = vrot.lane.b32.xlu0 %v327, 80
        %v357 = vpop.permute.xlu0 %356
        %s359 = scalar_lea.vmem %s259, 8 [#allocation8]
        %360 = vst.msk [vmem:[%s359] sm:$0xf] %vm323, %v357
        %361 = vrot.lane.b32.xlu0 %v327, 48
        %v362 = vpop.permute.xlu0 %361
        %s364 = scalar_lea.vmem %s266, 8 [#allocation10]
        %365 = vst.msk [vmem:[%s364] sm:$0xf] %vm323, %v362
        %366 = vrot.lane.b32.xlu0 %v327, 104
        %v367 = vpop.permute.xlu0 %366
        %s369 = scalar_lea.vmem %s252, 12 [#allocation7]
        %370 = vst.msk [vmem:[%s369] sm:$0xf] %vm323, %v367
        %371 = vrot.lane.b32.xlu0 %v327, 72
        %v372 = vpop.permute.xlu0 %371
        %s374 = scalar_lea.vmem %s259, 12 [#allocation8]
        %375 = vst.msk [vmem:[%s374] sm:$0xf] %vm323, %v372
        %376 = vrot.lane.b32.xlu0 %v327, 40
        %v377 = vpop.permute.xlu0 %376
        %s379 = scalar_lea.vmem %s266, 12 [#allocation10]
        %380 = vst.msk [vmem:[%s379] sm:$0xf] %vm323, %v377
        %s381 = sand.u32 %s97, 1
        %s382 = scalar_lea.sflag [#allocation4], %s381
        %s383 = sand.u32 %s97, 1
        %s384 = smul.addr %s383, 16
        %s385 = scalar_lea.vmem [#allocation7], %s384
        %s386 = sand.u32 %s26, 1
        %s387 = scalar_lea.sflag [#allocation9], %s386
        %s388 = sand.u32 %s125, 1
        %s389 = smul.addr %s388, 16
        %s390 = scalar_lea.vmem [#allocation8], %s389
        %s391 = sand.u32 %s26, 1
        %s392 = scalar_lea.sflag [#allocation9], %s391
        %s393 = sand.u32 %s153, 1
        %s394 = smul.addr %s393, 16
        %s395 = scalar_lea.vmem [#allocation10], %s394
        // Predicated region
        $region37: #{tpu_custom_call.1} parent=27 // pred_check
          %p396 = pneg %p107
        $region38: #{tpu_custom_call.1} parent=27 // pred_check_branch
          %398 = sbr.rel (%p396) target = $region40
        $region39: #{tpu_custom_call.1} parent=27 // pred_region
          %s400 = ssub.s32 256, 256
          %401 = vsyncadd %s382, %s400
          %s402 = smul.addr %s30, 4
          %s403 = sadd.s32 %s31, %s402
          %s404 = smul.addr %s403, 64
          %s405 = scalar_lea.hbm %s2, %s404
          %s406 = sshll.u32 %s385, 4
          %s407 = int_to_ptr.vmem [resolvable:$true] %s406
          %412 = dma.vmem_to_hbm [thread:$0]  %s407, 256, %s405, %s382, 64, 64, 4
        $region40: #{tpu_custom_call.1} parent=27 // pred_fallthru
          _
        // Predicated region
        $region41: #{tpu_custom_call.1} parent=27 // pred_check
          %p413 = pneg %p135
        $region42: #{tpu_custom_call.1} parent=27 // pred_check_branch
          %415 = sbr.rel (%p413) target = $region44
        $region43: #{tpu_custom_call.1} parent=27 // pred_region
          %s417 = ssub.s32 256, 256
          %418 = vsyncadd %s387, %s417
          %s419 = smul.addr %s30, 4
          %s420 = sadd.s32 %s31, %s419
          %s421 = smul.addr %s420, 64
          %s422 = scalar_lea.hbm %s3, %s421
          %s423 = sshll.u32 %s390, 4
          %s424 = int_to_ptr.vmem [resolvable:$true] %s423
          %429 = dma.vmem_to_hbm [thread:$0]  %s424, 256, %s422, %s387, 64, 64, 4
        $region44: #{tpu_custom_call.1} parent=27 // pred_fallthru
          _
        // Predicated region
        $region45: #{tpu_custom_call.1} parent=27 // pred_check
          %p430 = pneg %p163
        $region46: #{tpu_custom_call.1} parent=27 // pred_check_branch
          %432 = sbr.rel (%p430) target = $region48
        $region47: #{tpu_custom_call.1} parent=27 // pred_region
          %s434 = ssub.s32 256, 256
          %435 = vsyncadd %s392, %s434
          %s436 = smul.addr %s30, 4
          %s437 = sadd.s32 %s31, %s436
          %s438 = smul.addr %s437, 64
          %s439 = scalar_lea.hbm %s4, %s438
          %s440 = sshll.u32 %s395, 4
          %s441 = int_to_ptr.vmem [resolvable:$true] %s440
          %446 = dma.vmem_to_hbm [thread:$0]  %s441, 256, %s439, %s392, 64, 64, 4
        $region48: #{tpu_custom_call.1} parent=27 // pred_fallthru
          _
      $region28: #{tpu_custom_call.1} parent=5 // pred_fallthru
        _
      %p447 = scmp.le.s32.totalorder 2, %s21
      // Predicated region
      $region49: #{tpu_custom_call.1} parent=5 // pred_check
        %p448 = pneg %p447
      $region50: #{tpu_custom_call.1} parent=5 // pred_check_branch
        %450 = sbr.rel (%p448) target = $region52
      $region51: #{tpu_custom_call.1} parent=5 // pred_region
        %s451 = ssub.s32 %s21, 2
        // Predicated region
        $region53: #{tpu_custom_call.1} parent=51 // pred_check
          %p452 = pneg %p113
        $region54: #{tpu_custom_call.1} parent=51 // pred_check_branch
          %454 = sbr.rel (%p452) target = $region56
        $region55: #{tpu_custom_call.1} parent=51 // pred_region
          %s455 = sand.u32 %s98, 1
          %s456 = scalar_lea.sflag [#allocation4], %s455
          %s457 = sand.u32 %s98, 1
          %s458 = smul.addr %s457, 16
          %s459 = scalar_lea.vmem [#allocation7], %s458
          %460 = dma.done %s456, 256
        $region56: #{tpu_custom_call.1} parent=51 // pred_fallthru
          _
        // Predicated region
        $region57: #{tpu_custom_call.1} parent=51 // pred_check
          %p461 = pneg %p141
        $region58: #{tpu_custom_call.1} parent=51 // pred_check_branch
          %463 = sbr.rel (%p461) target = $region60
        $region59: #{tpu_custom_call.1} parent=51 // pred_region
          %s464 = sand.u32 %s27, 1
          %s465 = scalar_lea.sflag [#allocation9], %s464
          %s466 = sand.u32 %s126, 1
          %s467 = smul.addr %s466, 16
          %s468 = scalar_lea.vmem [#allocation8], %s467
          %469 = dma.done %s465, 256
        $region60: #{tpu_custom_call.1} parent=51 // pred_fallthru
          _
        // Predicated region
        $region61: #{tpu_custom_call.1} parent=51 // pred_check
          %p470 = pneg %p169
        $region62: #{tpu_custom_call.1} parent=51 // pred_check_branch
          %472 = sbr.rel (%p470) target = $region64
        $region63: #{tpu_custom_call.1} parent=51 // pred_region
          %s473 = sand.u32 %s27, 1
          %s474 = scalar_lea.sflag [#allocation9], %s473
          %s475 = sand.u32 %s154, 1
          %s476 = smul.addr %s475, 16
          %s477 = scalar_lea.vmem [#allocation10], %s476
          %478 = dma.done %s474, 256
        $region64: #{tpu_custom_call.1} parent=51 // pred_fallthru
          _
      $region52: #{tpu_custom_call.1} parent=5 // pred_fallthru
        _
    $region6: #{tpu_custom_call.1} parent=1 // loop_footer
      %s25 = sadd.s32 1, %s21
    $region7: #{tpu_custom_call.1} parent=1 // loop_footer_branch
      %20 = sbr.rel target = $region3
    $region8: #{tpu_custom_call.1} parent=1 // loop_exit
      _
    %479 = vsyncpa [#allocation3], 1
    %s480 = scalar_lea.sflag [#allocation3], 1
    %481 = vsyncpa %s480, 1
    %482 = vsyncpa [#allocation6], 1
    %483 = vsyncpa [#allocation4], 1
    %s484 = scalar_lea.sflag [#allocation4], 1
    %485 = vsyncpa %s484, 1
    %486 = vsyncpa [#allocation9], 1
    %s487 = scalar_lea.sflag [#allocation9], 1
    %488 = vsyncpa %s487, 1

</llo_original>
